<compile_context>
chip_gen: v7x
topology: tpu7x:2x2x1
jax: 0.10.0
libtpu: 0.0.40
codegen_flags: <defaults>
</compile_context>

<pallas_src>
import math

import jax
import jax.numpy as jnp
from jax import lax
from jax.experimental import pallas as pl
from jax.experimental.pallas import tpu as pltpu

LANE = 128   # lane width: E, H, C are zero-padded to multiples of this


def _round_up(x, m):
    return (x + m - 1) // m * m


def _vmem_capacity_bytes():
    try:
        info = pltpu.get_tpu_info()
        cap = getattr(info, "vmem_capacity_bytes", None)
        if cap:
            return int(cap)
    except Exception:
        pass
    return 64 * 1024 * 1024   # conservative = v7x per-TensorCore


def _choose_batch_tiling(B):
    """Pick the batch tile TB (multiple of 8 sublanes).  Prefer >=2 tiles so the
    'parallel' grid axis feeds both v7x TensorCores; grow toward 128 rows for
    large batches so fc1/fc2 use full MXU tiles."""
    b8 = _round_up(max(B, 1), 8)
    if b8 >= 256:
        tb = 128
    elif b8 > 8:
        tb = _round_up(b8 // 2, 8)      # two tiles
    else:
        tb = 8
    b_pad = _round_up(b8, tb)
    return tb, b_pad, b_pad // tb


def _mlp_tail(acc_ref, w1_ref, b1_ref, w2_ref, b2_ref, out_ref):
    """fc1 -> ReLU -> fc2 on the (TB, E_pad) averaged embeddings."""
    x = acc_ref[...]                                    # (TB, E_pad) f32
    w1 = w1_ref[...].astype(jnp.float32)
    b1 = b1_ref[...].astype(jnp.float32)
    w2 = w2_ref[...].astype(jnp.float32)
    b2 = b2_ref[...].astype(jnp.float32)
    h = jnp.dot(x, w1, preferred_element_type=jnp.float32) + b1
    h = jnp.maximum(h, 0.0)                             # (TB, H_pad)
    out_ref[...] = jnp.dot(h, w2, preferred_element_type=jnp.float32) + b2


def _make_resident_kernel(S, B, V):
    """Fast path: embedding table resident in VMEM; gather = dynamic VMEM reads
    with a register-carried per-row accumulator."""

    def kernel(ids_ref,    # SMEM (B_pad*S,) int32  [scalar prefetch]
               emb_ref,    # VMEM (V_pad, E_pad)    resident table
               w1_ref, b1_ref, w2_ref, b2_ref,
               out_ref,    # VMEM (TB, C_pad) f32
               acc_ref):   # VMEM (TB, E_pad) f32 scratch
        i = pl.program_id(0)
        tb, e_pad = acc_ref.shape
        inv_s = 1.0 / S
        base = i * (tb * S)
        valid = jnp.minimum(tb, B - i * tb)     # real rows in this tile

        acc_ref[...] = jnp.zeros_like(acc_ref)

        def row_body(r, carry):
            def tok_body(s, acc_row):
                tok = ids_ref[base + r * S + s]
                # PyTorch's nn.Embedding would raise on out-of-range ids;
                # clamp to stay in-bounds.
                tok = jnp.clip(tok, 0, V - 1)
                row = emb_ref[pl.ds(tok, 1), :].astype(jnp.float32)   # (1, E_pad)
                return acc_row + row

            acc_row = lax.fori_loop(0, S, tok_body,
                                    jnp.zeros((1, e_pad), jnp.float32),
                                    unroll=True)
            # One store per row (mean over the FULL sequence length, like torch).
            acc_ref[pl.ds(r, 1), :] = acc_row * inv_s
            return carry

        lax.fori_loop(0, valid, row_body, 0)
        _mlp_tail(acc_ref, w1_ref, b1_ref, w2_ref, b2_ref, out_ref)

    return kernel


def _make_hbm_kernel(S, B, V):
    """Fallback for tables too large for VMEM: per batch row, issue all S row
    DMAs concurrently into a double-buffered scratch, prefetching the next
    row's DMAs BEFORE waiting on the current row's; padding tokens (id==0)
    skip the DMA entirely (padding_idx row is all-zero)."""

    def kernel(ids_ref,    # SMEM (B_pad*S,) int32  [scalar prefetch]
               emb_hbm,    # HBM  (V_pad, 1, E_pad) [memory_space=pl.ANY]
               w1_ref, b1_ref, w2_ref, b2_ref,
               out_ref,    # VMEM (TB, C_pad) f32
               acc_ref,    # VMEM (TB, E_pad) f32 scratch
               rowbuf,     # VMEM (2, S, 1, E_pad) scratch (row double buffer)
               sem):       # DMA semaphores (2, S)
        i = pl.program_id(0)
        tb, e_pad = acc_ref.shape
        inv_s = 1.0 / S
        base = i * (tb * S)
        valid = jnp.minimum(tb, B - i * tb)

        def tok_at(r, s):
            t = ids_ref[base + r * S + s]
            return jnp.clip(t, 0, V - 1), t

        def start_row(r, slot):
            # Issue all S row copies for batch row r concurrently.
            for s in range(S):
                tokc, tok = tok_at(r, s)

                @pl.when(tok != 0)
                def _():
                    pltpu.make_async_copy(emb_hbm.at[tokc], rowbuf.at[slot, s],
                                          sem.at[slot, s]).start()

                @pl.when(tok == 0)
                def _():
                    # padding_idx row is all zeros; skip the HBM DMA.
                    rowbuf[slot, s] = jnp.zeros((1, e_pad), rowbuf.dtype)

        def wait_row(r, slot):
            for s in range(S):
                tokc, tok = tok_at(r, s)

                @pl.when(tok != 0)
                def _():
                    # Rebuild the descriptor with the real source row.
                    pltpu.make_async_copy(emb_hbm.at[tokc], rowbuf.at[slot, s],
                                          sem.at[slot, s]).wait()

        acc_ref[...] = jnp.zeros_like(acc_ref)
        start_row(0, 0)

        def row_body(r, carry):
            slot = r & 1
            # Prefetch the NEXT row before waiting on this one (start-before-wait).
            @pl.when(r + 1 < valid)
            def _():
                start_row(r + 1, 1 - slot)

            wait_row(r, slot)
            rows = rowbuf[slot].astype(jnp.float32)          # (S, 1, E_pad)
            acc_ref[pl.ds(r, 1), :] = jnp.sum(rows, axis=0) * inv_s
            return carry

        lax.fori_loop(0, valid, row_body, 0)
        _mlp_tail(acc_ref, w1_ref, b1_ref, w2_ref, b2_ref, out_ref)

    return kernel


def prepare_params(emb, w1, b1, w2, b2, storage_dtype=jnp.float32):
    """One-time layout prep (hoisted out of the per-call path): transpose
    torch-style weights to (in, out), zero-pad lane dims to 128 / vocab to 8,
    and optionally store table+weights in bf16 (biases stay f32)."""
    V, E = emb.shape
    H = w1.shape[0]
    C = w2.shape[0]
    V_pad = _round_up(V, 8)
    E_pad = _round_up(E, LANE)
    H_pad = _round_up(H, LANE)
    C_pad = _round_up(C, LANE)

    emb_p = jnp.zeros((V_pad, E_pad), storage_dtype).at[:V, :E].set(
        emb.astype(storage_dtype))
    w1_p = jnp.zeros((E_pad, H_pad), storage_dtype).at[:E, :H].set(
        w1.T.astype(storage_dtype))
    b1_p = jnp.zeros((1, H_pad), jnp.float32).at[0, :H].set(b1.astype(jnp.float32))
    w2_p = jnp.zeros((H_pad, C_pad), storage_dtype).at[:H, :C].set(
        w2.T.astype(storage_dtype))
    b2_p = jnp.zeros((1, C_pad), jnp.float32).at[0, :C].set(b2.astype(jnp.float32))
    meta = {"V": V, "E": E, "H": H, "C": C}
    return emb_p, w1_p, b1_p, w2_p, b2_p, meta


def intent_forward(ids, prepared, *, table_in_vmem=None):
    """ids: (B, S) int32.  prepared: output of prepare_params."""
    emb_p, w1_p, b1_p, w2_p, b2_p, meta = prepared
    B, S = ids.shape
    V, C = meta["V"], meta["C"]
    V_pad, E_pad = emb_p.shape
    H_pad = w1_p.shape[1]
    C_pad = w2_p.shape[1]
    itemsize = jnp.dtype(emb_p.dtype).itemsize

    TB, B_pad, nb = _choose_batch_tiling(B)

    # Flat 1-D ids in SMEM (2-D SMEM would pad the last dim to 128).
    ids_flat = jnp.zeros((B_pad * S,), jnp.int32).at[: B * S].set(
        ids.astype(jnp.int32).reshape(-1))

    # VMEM budgeting (double-buffer accounted); decide the fast path.
    cap = _vmem_capacity_bytes()
    table_bytes = emb_p.size * itemsize
    weight_bytes = (w1_p.size + w2_p.size) * itemsize + (b1_p.size + b2_p.size) * 4
    work_bytes = TB * E_pad * 4 + 2 * TB * C_pad * 4
    resident_need = 2 * table_bytes + 2 * weight_bytes + work_bytes + (2 << 20)
    if table_in_vmem is None:
        table_in_vmem = resident_need <= int(0.75 * cap)

    weight_specs = [
        pl.BlockSpec((E_pad, H_pad), lambda i, _sp: (0, 0)),
        pl.BlockSpec((1, H_pad), lambda i, _sp: (0, 0)),
        pl.BlockSpec((H_pad, C_pad), lambda i, _sp: (0, 0)),
        pl.BlockSpec((1, C_pad), lambda i, _sp: (0, 0)),
    ]

    flops = (2 * B_pad * S * E_pad          # gather + accumulate
             + 2 * B_pad * E_pad * H_pad    # fc1
             + 2 * B_pad * H_pad * C_pad)   # fc2

    if table_in_vmem:
        kernel = _make_resident_kernel(S, B, V)
        table_arg = emb_p
        in_specs = [pl.BlockSpec((V_pad, E_pad), lambda i, _sp: (0, 0))] + weight_specs
        scratch = [pltpu.VMEM((TB, E_pad), jnp.float32)]
        bytes_accessed = (ids_flat.size * 4 + table_bytes + weight_bytes
                          + B_pad * C_pad * 4)
        need = resident_need
    else:
        kernel = _make_hbm_kernel(S, B, V)
        table_arg = emb_p.reshape(V_pad, 1, E_pad)
        in_specs = [pl.BlockSpec(memory_space=pl.ANY)] + weight_specs
        scratch = [pltpu.VMEM((TB, E_pad), jnp.float32),
                   pltpu.VMEM((2, S, 1, E_pad), emb_p.dtype),
                   pltpu.SemaphoreType.DMA((2, S))]
        bytes_accessed = (ids_flat.size * 4 + B_pad * S * E_pad * itemsize
                          + weight_bytes + B_pad * C_pad * 4)
        # rowbuf sublane-pads 1 -> 8 internally; account for it.
        need = (2 * weight_bytes + work_bytes + 2 * S * 8 * E_pad * itemsize
                + (2 << 20))

    vmem_limit = int(min(cap, max(need + (8 << 20), 16 << 20)))

    out = pl.pallas_call(
        kernel,
        out_shape=jax.ShapeDtypeStruct((B_pad, C_pad), jnp.float32),
        grid_spec=pltpu.PrefetchScalarGridSpec(
            num_scalar_prefetch=1,                 # flat ids -> SMEM
            grid=(nb,),                            # one step per batch tile
            in_specs=in_specs,
            out_specs=pl.BlockSpec((TB, C_pad), lambda i, _sp: (i, 0)),
            scratch_shapes=scratch),
        compiler_params=pltpu.CompilerParams(
            dimension_semantics=("parallel",),     # batch tiles shard across TCs
            vmem_limit_bytes=vmem_limit),
        cost_estimate=pl.CostEstimate(flops=flops, transcendentals=0,
                                      bytes_accessed=bytes_accessed),
    )(ids_flat, table_arg, w1_p, b1_p, w2_p, b2_p)

    return out[:B, :C]


def init_params(key, vocab_size, embed_dim, hidden_dim, num_classes):
    k_emb, k_w1, k_b1, k_w2, k_b2 = jax.random.split(key, 5)
    # nn.Embedding: N(0, 1), row at padding_idx=0 zeroed.
    emb = jax.random.normal(k_emb, (vocab_size, embed_dim), jnp.float32)
    emb = emb.at[0].set(0.0)
    # nn.Linear: U(-1/sqrt(fan_in), 1/sqrt(fan_in)), torch weight shape (out, in).
    lim1 = 1.0 / math.sqrt(embed_dim)
    w1 = jax.random.uniform(k_w1, (hidden_dim, embed_dim), jnp.float32, -lim1, lim1)
    b1 = jax.random.uniform(k_b1, (hidden_dim,), jnp.float32, -lim1, lim1)
    lim2 = 1.0 / math.sqrt(hidden_dim)
    w2 = jax.random.uniform(k_w2, (num_classes, hidden_dim), jnp.float32, -lim2, lim2)
    b2 = jax.random.uniform(k_b2, (num_classes,), jnp.float32, -lim2, lim2)
    return emb, w1, b1, w2, b2


def reference_forward(ids, emb, w1, b1, w2, b2):
    """Pure-JAX reference mirroring the PyTorch forward."""
    x = emb[ids]                       # (B, S, E)
    x = x.mean(axis=1)                 # (B, E)
    x = jnp.maximum(x @ w1.T + b1, 0)  # (B, H)
    return x @ w2.T + b2               # (B, C)


if __name__ == "__main__":
    vocab_size, embed_dim, hidden_dim, num_classes = 64, 32, 32, 8
    key = jax.random.PRNGKey(0)
    k_params, k_ids, k_ids2 = jax.random.split(key, 3)
    emb, w1, b1, w2, b2 = init_params(k_params, vocab_size, embed_dim,
                                      hidden_dim, num_classes)
    # Hoisted, one-time parameter layout prep (transpose / pad).
    prepared = prepare_params(emb, w1, b1, w2, b2)

    # Small-shape check (B=2, S=8); exercise both the VMEM-resident-table fast
    # path and the pipelined HBM-gather fallback.
    ids = jax.random.randint(k_ids, (2, 8), 0, vocab_size, dtype=jnp.int32)
    ref = reference_forward(ids, emb, w1, b1, w2, b2)
    for resident in (True, False):
        out = jax.block_until_ready(intent_forward(ids, prepared,
                                                   table_in_vmem=resident))
        assert out.shape == (2, num_classes)
        assert jnp.allclose(out, ref, atol=1e-5, rtol=1e-5), (resident, out, ref)

    # Multi-tile batch with a ragged last tile (B=13 -> two batch tiles).
    ids2 = jax.random.randint(k_ids2, (13, 8), 0, vocab_size, dtype=jnp.int32)
    ref2 = reference_forward(ids2, emb, w1, b1, w2, b2)
    for resident in (True, False):
        out2 = jax.block_until_ready(intent_forward(ids2, prepared,
                                                    table_in_vmem=resident))
        assert out2.shape == (13, num_classes)
        assert jnp.allclose(out2, ref2, atol=1e-5, rtol=1e-5), (resident,)

    print("KERNEL_OK")
</pallas_src>

<mosaic_0001>
module attributes {stable_mosaic.version = 11 : i64} {
  func.func @kernel(%arg0: i32, %arg1: memref<64xi32, #tpu.memory_space<smem>>, %arg2: memref<64x128xf32, #tpu.memory_space<vmem>>, %arg3: memref<128x128xf32, #tpu.memory_space<vmem>>, %arg4: memref<1x128xf32, #tpu.memory_space<vmem>>, %arg5: memref<128x128xf32, #tpu.memory_space<vmem>>, %arg6: memref<1x128xf32, #tpu.memory_space<vmem>>, %arg7: memref<8x128xf32, #tpu.memory_space<vmem>>, %arg8: memref<8x128xf32, #tpu.memory_space<vmem>>) attributes {dimension_semantics = [#tpu.dimension_semantics<parallel>], iteration_bounds = array<i64: 1>, scalar_prefetch = 1 : i64, scratch_operands = 1 : i64, tpu.core_type = #tpu.core_type<tc>, window_params = [{pipeline_mode = #tpu.pipeline_mode<synchronous>, transform_indices = @transform_0, window_bounds = array<i64: 64, 128>}, {pipeline_mode = #tpu.pipeline_mode<synchronous>, transform_indices = @transform_1, window_bounds = array<i64: 128, 128>}, {pipeline_mode = #tpu.pipeline_mode<synchronous>, transform_indices = @transform_2, window_bounds = array<i64: 1, 128>}, {pipeline_mode = #tpu.pipeline_mode<synchronous>, transform_indices = @transform_3, window_bounds = array<i64: 128, 128>}, {pipeline_mode = #tpu.pipeline_mode<synchronous>, transform_indices = @transform_4, window_bounds = array<i64: 1, 128>}, {transform_indices = @transform_5, window_bounds = array<i64: 8, 128>}]} {
    %c64_i32 = arith.constant 64 : i32
    %0 = arith.muli %arg0, %c64_i32 : i32
    %c8_i32 = arith.constant 8 : i32
    %1 = arith.muli %arg0, %c8_i32 : i32
    %c2_i32 = arith.constant 2 : i32
    %2 = arith.subi %c2_i32, %1 : i32
    %c8_i32_0 = arith.constant 8 : i32
    %3 = arith.minsi %c8_i32_0, %2 : i32
    %cst = arith.constant 0.000000e+00 : f32
    %4 = vector.broadcast %cst : f32 to vector<8x128xf32>
    %c0 = arith.constant 0 : index
    %c0_1 = arith.constant 0 : index
    %5 = vector.load %arg8[%c0, %c0_1] : memref<8x128xf32, #tpu.memory_space<vmem>>, vector<8x128xf32>
    tpu.vector_store %arg8[%c0, %c0_1], %4 {strides = array<i32>} : memref<8x128xf32, #tpu.memory_space<vmem>>, vector<8x128xf32>,
    %c0_i32 = arith.constant 0 : i32
    %c0_i32_2 = arith.constant 0 : i32
    %6 = arith.subi %3, %c0_i32_2 : i32
    %7 = arith.addi %c0_i32_2, %6 : i32
    %c1_i32 = arith.constant 1 : i32
    scf.for %arg9 = %c0_i32_2 to %7 step %c1_i32  : i32 {
      %cst_18 = arith.constant 0.000000e+00 : f32
      %22 = vector.broadcast %cst_18 : f32 to vector<1x128xf32>
      %c0_i32_19 = arith.constant 0 : i32
      %c8_i32_20 = arith.constant 8 : i32
      %23 = arith.muli %arg9, %c8_i32_20 : i32
      %24 = arith.addi %0, %23 : i32
      %25 = arith.addi %24, %c0_i32_19 : i32
      %26 = arith.index_cast %25 : i32 to index
      %27 = memref.load %arg1[%26] : memref<64xi32, #tpu.memory_space<smem>>
      %c0_i32_21 = arith.constant 0 : i32
      %c63_i32 = arith.constant 63 : i32
      %28 = arith.maxsi %c0_i32_21, %27 : i32
      %29 = arith.minsi %c63_i32, %28 : i32
      %30 = arith.index_cast %29 : i32 to index
      %c0_22 = arith.constant 0 : index
      %31 = vector.load %arg2[%30, %c0_22] : memref<64x128xf32, #tpu.memory_space<vmem>>, vector<1x128xf32>
      %32 = arith.addf %22, %31 : vector<1x128xf32>
      %c1_i32_23 = arith.constant 1 : i32
      %c8_i32_24 = arith.constant 8 : i32
      %33 = arith.muli %arg9, %c8_i32_24 : i32
      %34 = arith.addi %0, %33 : i32
      %35 = arith.addi %34, %c1_i32_23 : i32
      %36 = arith.index_cast %35 : i32 to index
      %37 = memref.load %arg1[%36] : memref<64xi32, #tpu.memory_space<smem>>
      %c0_i32_25 = arith.constant 0 : i32
      %c63_i32_26 = arith.constant 63 : i32
      %38 = arith.maxsi %c0_i32_25, %37 : i32
      %39 = arith.minsi %c63_i32_26, %38 : i32
      %40 = arith.index_cast %39 : i32 to index
      %c0_27 = arith.constant 0 : index
      %41 = vector.load %arg2[%40, %c0_27] : memref<64x128xf32, #tpu.memory_space<vmem>>, vector<1x128xf32>
      %42 = arith.addf %32, %41 : vector<1x128xf32>
      %c2_i32_28 = arith.constant 2 : i32
      %c8_i32_29 = arith.constant 8 : i32
      %43 = arith.muli %arg9, %c8_i32_29 : i32
      %44 = arith.addi %0, %43 : i32
      %45 = arith.addi %44, %c2_i32_28 : i32
      %46 = arith.index_cast %45 : i32 to index
      %47 = memref.load %arg1[%46] : memref<64xi32, #tpu.memory_space<smem>>
      %c0_i32_30 = arith.constant 0 : i32
      %c63_i32_31 = arith.constant 63 : i32
      %48 = arith.maxsi %c0_i32_30, %47 : i32
      %49 = arith.minsi %c63_i32_31, %48 : i32
      %50 = arith.index_cast %49 : i32 to index
      %c0_32 = arith.constant 0 : index
      %51 = vector.load %arg2[%50, %c0_32] : memref<64x128xf32, #tpu.memory_space<vmem>>, vector<1x128xf32>
      %52 = arith.addf %42, %51 : vector<1x128xf32>
      %c3_i32 = arith.constant 3 : i32
      %c8_i32_33 = arith.constant 8 : i32
      %53 = arith.muli %arg9, %c8_i32_33 : i32
      %54 = arith.addi %0, %53 : i32
      %55 = arith.addi %54, %c3_i32 : i32
      %56 = arith.index_cast %55 : i32 to index
      %57 = memref.load %arg1[%56] : memref<64xi32, #tpu.memory_space<smem>>
      %c0_i32_34 = arith.constant 0 : i32
      %c63_i32_35 = arith.constant 63 : i32
      %58 = arith.maxsi %c0_i32_34, %57 : i32
      %59 = arith.minsi %c63_i32_35, %58 : i32
      %60 = arith.index_cast %59 : i32 to index
      %c0_36 = arith.constant 0 : index
      %61 = vector.load %arg2[%60, %c0_36] : memref<64x128xf32, #tpu.memory_space<vmem>>, vector<1x128xf32>
      %62 = arith.addf %52, %61 : vector<1x128xf32>
      %c4_i32 = arith.constant 4 : i32
      %c8_i32_37 = arith.constant 8 : i32
      %63 = arith.muli %arg9, %c8_i32_37 : i32
      %64 = arith.addi %0, %63 : i32
      %65 = arith.addi %64, %c4_i32 : i32
      %66 = arith.index_cast %65 : i32 to index
      %67 = memref.load %arg1[%66] : memref<64xi32, #tpu.memory_space<smem>>
      %c0_i32_38 = arith.constant 0 : i32
      %c63_i32_39 = arith.constant 63 : i32
      %68 = arith.maxsi %c0_i32_38, %67 : i32
      %69 = arith.minsi %c63_i32_39, %68 : i32
      %70 = arith.index_cast %69 : i32 to index
      %c0_40 = arith.constant 0 : index
      %71 = vector.load %arg2[%70, %c0_40] : memref<64x128xf32, #tpu.memory_space<vmem>>, vector<1x128xf32>
      %72 = arith.addf %62, %71 : vector<1x128xf32>
      %c5_i32 = arith.constant 5 : i32
      %c8_i32_41 = arith.constant 8 : i32
      %73 = arith.muli %arg9, %c8_i32_41 : i32
      %74 = arith.addi %0, %73 : i32
      %75 = arith.addi %74, %c5_i32 : i32
      %76 = arith.index_cast %75 : i32 to index
      %77 = memref.load %arg1[%76] : memref<64xi32, #tpu.memory_space<smem>>
      %c0_i32_42 = arith.constant 0 : i32
      %c63_i32_43 = arith.constant 63 : i32
      %78 = arith.maxsi %c0_i32_42, %77 : i32
      %79 = arith.minsi %c63_i32_43, %78 : i32
      %80 = arith.index_cast %79 : i32 to index
      %c0_44 = arith.constant 0 : index
      %81 = vector.load %arg2[%80, %c0_44] : memref<64x128xf32, #tpu.memory_space<vmem>>, vector<1x128xf32>
      %82 = arith.addf %72, %81 : vector<1x128xf32>
      %c6_i32 = arith.constant 6 : i32
      %c8_i32_45 = arith.constant 8 : i32
      %83 = arith.muli %arg9, %c8_i32_45 : i32
      %84 = arith.addi %0, %83 : i32
      %85 = arith.addi %84, %c6_i32 : i32
      %86 = arith.index_cast %85 : i32 to index
      %87 = memref.load %arg1[%86] : memref<64xi32, #tpu.memory_space<smem>>
      %c0_i32_46 = arith.constant 0 : i32
      %c63_i32_47 = arith.constant 63 : i32
      %88 = arith.maxsi %c0_i32_46, %87 : i32
      %89 = arith.minsi %c63_i32_47, %88 : i32
      %90 = arith.index_cast %89 : i32 to index
      %c0_48 = arith.constant 0 : index
      %91 = vector.load %arg2[%90, %c0_48] : memref<64x128xf32, #tpu.memory_space<vmem>>, vector<1x128xf32>
      %92 = arith.addf %82, %91 : vector<1x128xf32>
      %c7_i32 = arith.constant 7 : i32
      %c8_i32_49 = arith.constant 8 : i32
      %93 = arith.muli %arg9, %c8_i32_49 : i32
      %94 = arith.addi %0, %93 : i32
      %95 = arith.addi %94, %c7_i32 : i32
      %96 = arith.index_cast %95 : i32 to index
      %97 = memref.load %arg1[%96] : memref<64xi32, #tpu.memory_space<smem>>
      %c0_i32_50 = arith.constant 0 : i32
      %c63_i32_51 = arith.constant 63 : i32
      %98 = arith.maxsi %c0_i32_50, %97 : i32
      %99 = arith.minsi %c63_i32_51, %98 : i32
      %100 = arith.index_cast %99 : i32 to index
      %c0_52 = arith.constant 0 : index
      %101 = vector.load %arg2[%100, %c0_52] : memref<64x128xf32, #tpu.memory_space<vmem>>, vector<1x128xf32>
      %102 = arith.addf %92, %101 : vector<1x128xf32>
      %c8_i32_53 = arith.constant 8 : i32
      %cst_54 = arith.constant 1.250000e-01 : f32
      %103 = vector.broadcast %cst_54 : f32 to vector<1x128xf32>
      %104 = arith.mulf %102, %103 : vector<1x128xf32>
      %105 = arith.index_cast %arg9 : i32 to index
      %c0_55 = arith.constant 0 : index
      %106 = vector.load %arg8[%105, %c0_55] : memref<8x128xf32, #tpu.memory_space<vmem>>, vector<1x128xf32>
      tpu.vector_store %arg8[%105, %c0_55], %104 {strides = array<i32>} : memref<8x128xf32, #tpu.memory_space<vmem>>, vector<1x128xf32>,
    }
    %c0_3 = arith.constant 0 : index
    %c0_4 = arith.constant 0 : index
    %8 = vector.load %arg8[%c0_3, %c0_4] : memref<8x128xf32, #tpu.memory_space<vmem>>, vector<8x128xf32>
    %c0_5 = arith.constant 0 : index
    %c0_6 = arith.constant 0 : index
    %9 = vector.load %arg3[%c0_5, %c0_6] : memref<128x128xf32, #tpu.memory_space<vmem>>, vector<128x128xf32>
    %c0_7 = arith.constant 0 : index
    %c0_8 = arith.constant 0 : index
    %10 = vector.load %arg4[%c0_7, %c0_8] : memref<1x128xf32, #tpu.memory_space<vmem>>, vector<1x128xf32>
    %c0_9 = arith.constant 0 : index
    %c0_10 = arith.constant 0 : index
    %11 = vector.load %arg5[%c0_9, %c0_10] : memref<128x128xf32, #tpu.memory_space<vmem>>, vector<128x128xf32>
    %c0_11 = arith.constant 0 : index
    %c0_12 = arith.constant 0 : index
    %12 = vector.load %arg6[%c0_11, %c0_12] : memref<1x128xf32, #tpu.memory_space<vmem>>, vector<1x128xf32>
    %cst_13 = arith.constant dense<0.000000e+00> : vector<8x128xf32>
    %13 = tpu.matmul %8, %9, %cst_13 {dimension_numbers = #tpu.dot_dimension_numbers<[1], [0], [0], [1], [0, 0, 1, 1], [], []>} : vector<8x128xf32>, vector<128x128xf32>, vector<8x128xf32> -> vector<8x128xf32>
    %14 = vector.broadcast %10 : vector<1x128xf32> to vector<8x128xf32>
    %15 = arith.addf %13, %14 : vector<8x128xf32>
    %cst_14 = arith.constant 0.000000e+00 : f32
    %16 = vector.broadcast %cst_14 : f32 to vector<8x128xf32>
    %17 = arith.maximumf %15, %16 : vector<8x128xf32>
    %cst_15 = arith.constant dense<0.000000e+00> : vector<8x128xf32>
    %18 = tpu.matmul %17, %11, %cst_15 {dimension_numbers = #tpu.dot_dimension_numbers<[1], [0], [0], [1], [0, 0, 1, 1], [], []>} : vector<8x128xf32>, vector<128x128xf32>, vector<8x128xf32> -> vector<8x128xf32>
    %19 = vector.broadcast %12 : vector<1x128xf32> to vector<8x128xf32>
    %20 = arith.addf %18, %19 : vector<8x128xf32>
    %c0_16 = arith.constant 0 : index
    %c0_17 = arith.constant 0 : index
    %21 = vector.load %arg7[%c0_16, %c0_17] : memref<8x128xf32, #tpu.memory_space<vmem>>, vector<8x128xf32>
    tpu.vector_store %arg7[%c0_16, %c0_17], %20 {strides = array<i32>} : memref<8x128xf32, #tpu.memory_space<vmem>>, vector<8x128xf32>,
    return
  }
  func.func @transform_0(%arg0: i32, %arg1: memref<64xi32, #tpu.memory_space<smem>>) -> (i32, i32) {
    %c0_i32 = arith.constant 0 : i32
    %c0_i32_0 = arith.constant 0 : i32
    %c0_i32_1 = arith.constant 0 : i32
    return %c0_i32, %c0_i32_0 : i32, i32
  }
  func.func @transform_1(%arg0: i32, %arg1: memref<64xi32, #tpu.memory_space<smem>>) -> (i32, i32) {
    %c0_i32 = arith.constant 0 : i32
    %c0_i32_0 = arith.constant 0 : i32
    %c0_i32_1 = arith.constant 0 : i32
    return %c0_i32, %c0_i32_0 : i32, i32
  }
  func.func @transform_2(%arg0: i32, %arg1: memref<64xi32, #tpu.memory_space<smem>>) -> (i32, i32) {
    %c0_i32 = arith.constant 0 : i32
    %c0_i32_0 = arith.constant 0 : i32
    %c0_i32_1 = arith.constant 0 : i32
    return %c0_i32, %c0_i32_0 : i32, i32
  }
  func.func @transform_3(%arg0: i32, %arg1: memref<64xi32, #tpu.memory_space<smem>>) -> (i32, i32) {
    %c0_i32 = arith.constant 0 : i32
    %c0_i32_0 = arith.constant 0 : i32
    %c0_i32_1 = arith.constant 0 : i32
    return %c0_i32, %c0_i32_0 : i32, i32
  }
  func.func @transform_4(%arg0: i32, %arg1: memref<64xi32, #tpu.memory_space<smem>>) -> (i32, i32) {
    %c0_i32 = arith.constant 0 : i32
    %c0_i32_0 = arith.constant 0 : i32
    %c0_i32_1 = arith.constant 0 : i32
    return %c0_i32, %c0_i32_0 : i32, i32
  }
  func.func @transform_5(%arg0: i32, %arg1: memref<64xi32, #tpu.memory_space<smem>>) -> (i32, i32) {
    %c0_i32 = arith.constant 0 : i32
    %c0_i32_0 = arith.constant 0 : i32
    return %arg0, %c0_i32 : i32, i32
  }
}

</mosaic_0001>

<llo_original>
// kernel: tpu_custom_call.1
$region0: #{tpu_custom_call.1}
  #allocation0 [shape = 'u32[]', space=smem, size = 0x4, offset = 0x4, fixed_abs, tag = 'smem constant byte address 0x4 - core index']
  #allocation1 [shape = 'u32[144,128]{1,0:T(1,128)}', space=vmem, size = 0x12000, scoped, tag = 'internal scratch']
  #allocation2 [shape = 'f32[8,128]{1,0:T(8,128)}', space=vmem, size = 0x1000, scoped, tag = 'scratch operand']
  #allocation3 [shape = 's32[1]{0}', space=sflag, size = 0x4, scoped, tag = 'scoped memory for tpu_custom_call.1']
  #allocation4 [shape = 'u8[512]{0}', space=smem, size = 0x200, scoped, tag = 'prefetched SMEM operand 0']
  %s0 = inlined_call_operand.hbm [shape: s32[64], index: 0, kind: input, shape index: {}]
  %s1 = inlined_call_operand.hbm [shape: f32[64,128], index: 1, kind: input, shape index: {}]
  %s2 = inlined_call_operand.hbm [shape: f32[128,128], index: 2, kind: input, shape index: {}]
  %s3 = inlined_call_operand.vmem [shape: f32[1,128], index: 3, kind: input, shape index: {}]
  %s4 = inlined_call_operand.hbm [shape: f32[128,128], index: 4, kind: input, shape index: {}]
  %s5 = inlined_call_operand.vmem [shape: f32[1,128], index: 5, kind: input, shape index: {}]
  %s6 = inlined_call_operand.hbm [shape: f32[8,128], index: 6, kind: output, shape index: {}]
  %s7 = sld [smem:[#allocation0]]
  $region49: #{tpu_custom_call.1} parent=0
    _
  %s9 = ssub.s32 1, %s7
  %s10 = scalar_select 0, %s9, %s7
  %12 = dma.hbm_to_smem %s0, 16, [#allocation4], [#allocation3]
  %13 = dma.done [#allocation3], 16
  %14 = sfence
  $region1: #{tpu_custom_call.1} parent=0
    #allocation5 [shape = 'u8[32768]{0}', space=vmem, size = 0x8000, scoped, tag = 'input window, operand 1, single buffered']
    #allocation6 [shape = 's32[1]{0}', space=sflag, size = 0x4, scoped, tag = 'scoped memory for tpu_custom_call.1']
    #allocation7 [shape = 's32[1]{0}', space=sflag, size = 0x4, scoped, tag = 'scoped memory for tpu_custom_call.1']
    #allocation8 [shape = 'u8[65536]{0}', space=vmem, size = 0x10000, scoped, tag = 'input window, operand 2, single buffered']
    #allocation9 [shape = 's32[1]{0}', space=sflag, size = 0x4, scoped, tag = 'scoped memory for tpu_custom_call.1']
    #allocation10 [shape = 'u8[65536]{0}', space=vmem, size = 0x10000, scoped, tag = 'input window, operand 4, single buffered']
    #allocation11 [shape = 'u8[4096]{0}', space=vmem, size = 0x1000, scoped, tag = 'output window, operand 0, single buffered']
    %15 = vsyncpa [#allocation6], 0
    %16 = vsyncpa [#allocation9], 0
    %17 = vsyncpa [#allocation7], 0
    // Predicated region
    $region2: #{tpu_custom_call.1} parent=1 // pred_check
      _
    $region3: #{tpu_custom_call.1} parent=1 // pred_check_branch
      %19 = sbr.rel (0) target = $region5
    $region4: #{tpu_custom_call.1} parent=1 // pred_region
      %s21 = ssub.s32 1024, 1024
      %22 = vsyncadd [#allocation6], %s21
      %s23 = sshll.u32 [#allocation5], 4
      %s24 = int_to_ptr.vmem [resolvable:$true] %s23
      %29 = dma.hbm_to_vmem [thread:$0]  %s1, 1024, %s24, [#allocation6], 128, 128, 8
    $region5: #{tpu_custom_call.1} parent=1 // pred_fallthru
      _
    // Predicated region
    $region6: #{tpu_custom_call.1} parent=1 // pred_check
      _
    $region7: #{tpu_custom_call.1} parent=1 // pred_check_branch
      %31 = sbr.rel (0) target = $region9
    $region8: #{tpu_custom_call.1} parent=1 // pred_region
      %s33 = ssub.s32 2048, 2048
      %34 = vsyncadd [#allocation9], %s33
      %s35 = sshll.u32 [#allocation8], 4
      %s36 = int_to_ptr.vmem [resolvable:$true] %s35
      %41 = dma.hbm_to_vmem [thread:$0]  %s2, 2048, %s36, [#allocation9], 128, 128, 8
    $region9: #{tpu_custom_call.1} parent=1 // pred_fallthru
      _
    // Predicated region
    $region10: #{tpu_custom_call.1} parent=1 // pred_check
      _
    $region11: #{tpu_custom_call.1} parent=1 // pred_check_branch
      %43 = sbr.rel (0) target = $region13
    $region12: #{tpu_custom_call.1} parent=1 // pred_region
      _
    $region13: #{tpu_custom_call.1} parent=1 // pred_fallthru
      _
    // Predicated region
    $region14: #{tpu_custom_call.1} parent=1 // pred_check
      _
    $region15: #{tpu_custom_call.1} parent=1 // pred_check_branch
      %45 = sbr.rel (0) target = $region17
    $region16: #{tpu_custom_call.1} parent=1 // pred_region
      %s47 = ssub.s32 2048, 2048
      %48 = vsyncadd [#allocation9], %s47
      %s49 = sshll.u32 [#allocation10], 4
      %s50 = int_to_ptr.vmem [resolvable:$true] %s49
      %55 = dma.hbm_to_vmem [thread:$0]  %s4, 2048, %s50, [#allocation9], 128, 128, 8
    $region17: #{tpu_custom_call.1} parent=1 // pred_fallthru
      _
    // Predicated region
    $region18: #{tpu_custom_call.1} parent=1 // pred_check
      _
    $region19: #{tpu_custom_call.1} parent=1 // pred_check_branch
      %57 = sbr.rel (0) target = $region21
    $region20: #{tpu_custom_call.1} parent=1 // pred_region
      _
    $region21: #{tpu_custom_call.1} parent=1 // pred_fallthru
      _
    // Predicated region
    $region22: #{tpu_custom_call.1} parent=1 // pred_check
      _
    $region23: #{tpu_custom_call.1} parent=1 // pred_check_branch
      %59 = sbr.rel (0) target = $region25
    $region24: #{tpu_custom_call.1} parent=1 // pred_region
      %60 = dma.done [#allocation6], 1024
    $region25: #{tpu_custom_call.1} parent=1 // pred_fallthru
      _
    // Predicated region
    $region26: #{tpu_custom_call.1} parent=1 // pred_check
      _
    $region27: #{tpu_custom_call.1} parent=1 // pred_check_branch
      %62 = sbr.rel (0) target = $region29
    $region28: #{tpu_custom_call.1} parent=1 // pred_region
      %63 = dma.done [#allocation9], 2048
    $region29: #{tpu_custom_call.1} parent=1 // pred_fallthru
      _
    // Predicated region
    $region30: #{tpu_custom_call.1} parent=1 // pred_check
      _
    $region31: #{tpu_custom_call.1} parent=1 // pred_check_branch
      %65 = sbr.rel (0) target = $region33
    $region32: #{tpu_custom_call.1} parent=1 // pred_region
      %66 = dma.done [#allocation9], 2048
    $region33: #{tpu_custom_call.1} parent=1 // pred_fallthru
      _
    %s67 = smul.u32 0, 64
    %s68 = smul.u32 0, 8
    %s69 = ssub.s32 2, %s68
    %p70 = scmp.lt.s32.totalorder %s69, 8
    %s71 = scalar_select %p70, %s69, 8
    %72 = vst [vmem:[#allocation2] sm:$0xff] 0.0
    // While loop
    $region34: #{tpu_custom_call.1} parent=1 // loop_pre_header
      _
    $region35: #{tpu_custom_call.1} parent=1 // loop_header
      %s74 = sphi 0, %s76
      %p75 = scmp.ge.s32.totalorder %s74, %s71
    $region36: #{tpu_custom_call.1} parent=1 // loop_header_branch
      %78 = sbr.rel (%p75) target = $region40
    $region37: #{tpu_custom_call.1} parent=1 // loop_body
      %s79 = smul.u32 %s74, 8
      %s80 = sadd.s32 %s67, %s79
      %s81 = sld [smem:[#allocation4 + %s80]]
      %p82 = scmp.gt.s32.totalorder %s81, 0
      %s83 = scalar_select %p82, %s81, 0
      %p84 = scmp.lt.s32.totalorder %s83, 63
      %s85 = scalar_select %p84, %s83, 63
      %s86 = scalar_lea.vmem [#allocation5], %s85
      %v87 = vld [vmem:[%s86] sm:$0x1]
      %v88 = vadd.f32 %v87, 0.0
      %s89 = sadd.s32 %s80, 1
      %s90 = sld [smem:[#allocation4 + %s89]]
      %p91 = scmp.gt.s32.totalorder %s90, 0
      %s92 = scalar_select %p91, %s90, 0
      %p93 = scmp.lt.s32.totalorder %s92, 63
      %s94 = scalar_select %p93, %s92, 63
      %s95 = scalar_lea.vmem [#allocation5], %s94
      %v96 = vld [vmem:[%s95] sm:$0x1]
      %v97 = vadd.f32 %v88, %v96
      %s98 = sadd.s32 %s80, 2
      %s99 = sld [smem:[#allocation4 + %s98]]
      %p100 = scmp.gt.s32.totalorder %s99, 0
      %s101 = scalar_select %p100, %s99, 0
      %p102 = scmp.lt.s32.totalorder %s101, 63
      %s103 = scalar_select %p102, %s101, 63
      %s104 = scalar_lea.vmem [#allocation5], %s103
      %v105 = vld [vmem:[%s104] sm:$0x1]
      %v106 = vadd.f32 %v97, %v105
      %s107 = sadd.s32 %s80, 3
      %s108 = sld [smem:[#allocation4 + %s107]]
      %p109 = scmp.gt.s32.totalorder %s108, 0
      %s110 = scalar_select %p109, %s108, 0
      %p111 = scmp.lt.s32.totalorder %s110, 63
      %s112 = scalar_select %p111, %s110, 63
      %s113 = scalar_lea.vmem [#allocation5], %s112
      %v114 = vld [vmem:[%s113] sm:$0x1]
      %v115 = vadd.f32 %v106, %v114
      %s116 = sadd.s32 %s80, 4
      %s117 = sld [smem:[#allocation4 + %s116]]
      %p118 = scmp.gt.s32.totalorder %s117, 0
      %s119 = scalar_select %p118, %s117, 0
      %p120 = scmp.lt.s32.totalorder %s119, 63
      %s121 = scalar_select %p120, %s119, 63
      %s122 = scalar_lea.vmem [#allocation5], %s121
      %v123 = vld [vmem:[%s122] sm:$0x1]
      %v124 = vadd.f32 %v115, %v123
      %s125 = sadd.s32 %s80, 5
      %s126 = sld [smem:[#allocation4 + %s125]]
      %p127 = scmp.gt.s32.totalorder %s126, 0
      %s128 = scalar_select %p127, %s126, 0
      %p129 = scmp.lt.s32.totalorder %s128, 63
      %s130 = scalar_select %p129, %s128, 63
      %s131 = scalar_lea.vmem [#allocation5], %s130
      %v132 = vld [vmem:[%s131] sm:$0x1]
      %v133 = vadd.f32 %v124, %v132
      %s134 = sadd.s32 %s80, 6
      %s135 = sld [smem:[#allocation4 + %s134]]
      %p136 = scmp.gt.s32.totalorder %s135, 0
      %s137 = scalar_select %p136, %s135, 0
      %p138 = scmp.lt.s32.totalorder %s137, 63
      %s139 = scalar_select %p138, %s137, 63
      %s140 = scalar_lea.vmem [#allocation5], %s139
      %v141 = vld [vmem:[%s140] sm:$0x1]
      %v142 = vadd.f32 %v133, %v141
      %s143 = sadd.s32 %s80, 7
      %s144 = sld [smem:[#allocation4 + %s143]]
      %p145 = scmp.gt.s32.totalorder %s144, 0
      %s146 = scalar_select %p145, %s144, 0
      %p147 = scmp.lt.s32.totalorder %s146, 63
      %s148 = scalar_select %p147, %s146, 63
      %s149 = scalar_lea.vmem [#allocation5], %s148
      %v150 = vld [vmem:[%s149] sm:$0x1]
      %v151 = vadd.f32 %v142, %v150
      %v152 = vmul.f32 %v151, 0.125
      %s153 = scalar_lea.vmem [#allocation2], %s74
      %154 = vst [vmem:[%s153] sm:$0x1] %v152
    $region38: #{tpu_custom_call.1} parent=1 // loop_footer
      %s76 = sadd.s32 %s74, 1
    $region39: #{tpu_custom_call.1} parent=1 // loop_footer_branch
      %73 = sbr.rel target = $region35
    $region40: #{tpu_custom_call.1} parent=1 // loop_exit
      _
    %v155 = vld [vmem:[#allocation2] sm:$0xff]
    %v156 = vld [vmem:[#allocation8] sm:$0xff]
    %v157 = vld [vmem:[#allocation8 + $0x8] sm:$0xff]
    %v158 = vld [vmem:[#allocation8 + $0x10] sm:$0xff]
    %v159 = vld [vmem:[#allocation8 + $0x18] sm:$0xff]
    %v160 = vld [vmem:[#allocation8 + $0x20] sm:$0xff]
    %v161 = vld [vmem:[#allocation8 + $0x28] sm:$0xff]
    %v162 = vld [vmem:[#allocation8 + $0x30] sm:$0xff]
    %v163 = vld [vmem:[#allocation8 + $0x38] sm:$0xff]
    %v164 = vld [vmem:[#allocation8 + $0x40] sm:$0xff]
    %v165 = vld [vmem:[#allocation8 + $0x48] sm:$0xff]
    %v166 = vld [vmem:[#allocation8 + $0x50] sm:$0xff]
    %v167 = vld [vmem:[#allocation8 + $0x58] sm:$0xff]
    %v168 = vld [vmem:[#allocation8 + $0x60] sm:$0xff]
    %v169 = vld [vmem:[#allocation8 + $0x68] sm:$0xff]
    %v170 = vld [vmem:[#allocation8 + $0x70] sm:$0xff]
    %v171 = vld [vmem:[#allocation8 + $0x78] sm:$0xff]
    %v172 = vld [vmem:[%s3] sm:$0x1]
    %v173 = vld [vmem:[#allocation10] sm:$0xff]
    %v174 = vld [vmem:[#allocation10 + $0x8] sm:$0xff]
    %v175 = vld [vmem:[#allocation10 + $0x10] sm:$0xff]
    %v176 = vld [vmem:[#allocation10 + $0x18] sm:$0xff]
    %v177 = vld [vmem:[#allocation10 + $0x20] sm:$0xff]
    %v178 = vld [vmem:[#allocation10 + $0x28] sm:$0xff]
    %v179 = vld [vmem:[#allocation10 + $0x30] sm:$0xff]
    %v180 = vld [vmem:[#allocation10 + $0x38] sm:$0xff]
    %v181 = vld [vmem:[#allocation10 + $0x40] sm:$0xff]
    %v182 = vld [vmem:[#allocation10 + $0x48] sm:$0xff]
    %v183 = vld [vmem:[#allocation10 + $0x50] sm:$0xff]
    %v184 = vld [vmem:[#allocation10 + $0x58] sm:$0xff]
    %v185 = vld [vmem:[#allocation10 + $0x60] sm:$0xff]
    %v186 = vld [vmem:[#allocation10 + $0x68] sm:$0xff]
    %v187 = vld [vmem:[#allocation10 + $0x70] sm:$0xff]
    %v188 = vld [vmem:[#allocation10 + $0x78] sm:$0xff]
    %v189 = vld [vmem:[%s5] sm:$0x1]
    %v191 = vlaneseq
    %v192 = vshrl.u32 %v191, 7
    %v193 = vsub.s32 0, %v192
    %v194 = vrot.slane %v172, %v193
    %196 = vmatprep.subr.mxu0 0.0
    %197 = vmatpush1.msra.mxu0 %v156
    %198 = vmatprep.subr.mxu0 0.0
    %199 = vmatpush1.msra.mxu0 %v157
    %200 = vmatprep.subr.mxu0 0.0
    %201 = vmatpush1.msra.mxu0 %v158
    %202 = vmatprep.subr.mxu0 0.0
    %203 = vmatpush1.msra.mxu0 %v159
    %204 = vmatprep.subr.mxu0 0.0
    %205 = vmatpush1.msra.mxu0 %v160
    %206 = vmatprep.subr.mxu0 0.0
    %207 = vmatpush1.msra.mxu0 %v161
    %208 = vmatprep.subr.mxu0 0.0
    %209 = vmatpush1.msra.mxu0 %v162
    %210 = vmatprep.subr.mxu0 0.0
    %211 = vmatpush1.msra.mxu0 %v163
    %212 = vmatprep.subr.mxu0 0.0
    %213 = vmatpush1.msra.mxu0 %v164
    %214 = vmatprep.subr.mxu0 0.0
    %215 = vmatpush1.msra.mxu0 %v165
    %216 = vmatprep.subr.mxu0 0.0
    %217 = vmatpush1.msra.mxu0 %v166
    %218 = vmatprep.subr.mxu0 0.0
    %219 = vmatpush1.msra.mxu0 %v167
    %220 = vmatprep.subr.mxu0 0.0
    %221 = vmatpush1.msra.mxu0 %v168
    %222 = vmatprep.subr.mxu0 0.0
    %223 = vmatpush1.msra.mxu0 %v169
    %224 = vmatprep.subr.mxu0 0.0
    %225 = vmatpush1.msra.mxu0 %v170
    %226 = vmatprep.subr.mxu0 0.0
    %227 = vmatpush1.msra.mxu0 %v171
    %228 = vmatprep.subr.mxu0 0.0
    %229 = vmatpush1.msra.mxu0 0.0
    %230 = vmatprep.subr.mxu0 0.0
    %231 = vmatpush1.msra.mxu0 0.0
    %232 = vmatprep.subr.mxu0 0.0
    %233 = vmatpush1.msra.mxu0 0.0
    %234 = vmatprep.subr.mxu0 0.0
    %235 = vmatpush1.msra.mxu0 0.0
    %236 = vmatprep.subr.mxu0 0.0
    %237 = vmatpush1.msra.mxu0 0.0
    %238 = vmatprep.subr.mxu0 0.0
    %239 = vmatpush1.msra.mxu0 0.0
    %240 = vmatprep.subr.mxu0 0.0
    %241 = vmatpush1.msra.mxu0 0.0
    %242 = vmatprep.subr.mxu0 0.0
    %243 = vmatpush1.msra.mxu0 0.0
    %244 = vmatprep.subr.mxu0 0.0
    %245 = vmatpush1.msra.mxu0 0.0
    %246 = vmatprep.subr.mxu0 0.0
    %247 = vmatpush1.msra.mxu0 0.0
    %248 = vmatprep.subr.mxu0 0.0
    %249 = vmatpush1.msra.mxu0 0.0
    %250 = vmatprep.subr.mxu0 0.0
    %251 = vmatpush1.msra.mxu0 0.0
    %252 = vmatprep.subr.mxu0 0.0
    %253 = vmatpush1.msra.mxu0 0.0
    %254 = vmatprep.subr.mxu0 0.0
    %255 = vmatpush1.msra.mxu0 0.0
    %256 = vmatprep.subr.mxu0 0.0
    %257 = vmatpush1.msra.mxu0 0.0
    %258 = vmatprep.subr.mxu0 0.0
    %259 = vmatpush1.msra.mxu0 0.0
    %260 = vmatprep.mubr.f32.mxu0 0.0
    %261 = vmatmul.mubr.f32.gmra.mrb[0].mxu0 %v155
    %v262 = vpop.f32.mrb[0].mxu0
    %v263 = vadd.f32 %v194, %v262
    %v264 = vpop.f32.mrb[0].mxu0
    %265 = vdwg.mxu0
    %v266 = vmax.f32 %v263, 0.0
    %v268 = vlaneseq
    %v269 = vshrl.u32 %v268, 7
    %v270 = vsub.s32 0, %v269
    %v271 = vrot.slane %v189, %v270
    %273 = vmatprep.subr.mxu0 0.0
    %274 = vmatpush1.msra.mxu0 %v173
    %275 = vmatprep.subr.mxu0 0.0
    %276 = vmatpush1.msra.mxu0 %v174
    %277 = vmatprep.subr.mxu0 0.0
    %278 = vmatpush1.msra.mxu0 %v175
    %279 = vmatprep.subr.mxu0 0.0
    %280 = vmatpush1.msra.mxu0 %v176
    %281 = vmatprep.subr.mxu0 0.0
    %282 = vmatpush1.msra.mxu0 %v177
    %283 = vmatprep.subr.mxu0 0.0
    %284 = vmatpush1.msra.mxu0 %v178
    %285 = vmatprep.subr.mxu0 0.0
    %286 = vmatpush1.msra.mxu0 %v179
    %287 = vmatprep.subr.mxu0 0.0
    %288 = vmatpush1.msra.mxu0 %v180
    %289 = vmatprep.subr.mxu0 0.0
    %290 = vmatpush1.msra.mxu0 %v181
    %291 = vmatprep.subr.mxu0 0.0
    %292 = vmatpush1.msra.mxu0 %v182
    %293 = vmatprep.subr.mxu0 0.0
    %294 = vmatpush1.msra.mxu0 %v183
    %295 = vmatprep.subr.mxu0 0.0
    %296 = vmatpush1.msra.mxu0 %v184
    %297 = vmatprep.subr.mxu0 0.0
    %298 = vmatpush1.msra.mxu0 %v185
    %299 = vmatprep.subr.mxu0 0.0
    %300 = vmatpush1.msra.mxu0 %v186
    %301 = vmatprep.subr.mxu0 0.0
    %302 = vmatpush1.msra.mxu0 %v187
    %303 = vmatprep.subr.mxu0 0.0
    %304 = vmatpush1.msra.mxu0 %v188
    %305 = vmatprep.subr.mxu0 0.0
    %306 = vmatpush1.msra.mxu0 0.0
    %307 = vmatprep.subr.mxu0 0.0
    %308 = vmatpush1.msra.mxu0 0.0
    %309 = vmatprep.subr.mxu0 0.0
    %310 = vmatpush1.msra.mxu0 0.0
    %311 = vmatprep.subr.mxu0 0.0
    %312 = vmatpush1.msra.mxu0 0.0
    %313 = vmatprep.subr.mxu0 0.0
    %314 = vmatpush1.msra.mxu0 0.0
    %315 = vmatprep.subr.mxu0 0.0
    %316 = vmatpush1.msra.mxu0 0.0
    %317 = vmatprep.subr.mxu0 0.0
    %318 = vmatpush1.msra.mxu0 0.0
    %319 = vmatprep.subr.mxu0 0.0
    %320 = vmatpush1.msra.mxu0 0.0
    %321 = vmatprep.subr.mxu0 0.0
    %322 = vmatpush1.msra.mxu0 0.0
    %323 = vmatprep.subr.mxu0 0.0
    %324 = vmatpush1.msra.mxu0 0.0
    %325 = vmatprep.subr.mxu0 0.0
    %326 = vmatpush1.msra.mxu0 0.0
    %327 = vmatprep.subr.mxu0 0.0
    %328 = vmatpush1.msra.mxu0 0.0
    %329 = vmatprep.subr.mxu0 0.0
    %330 = vmatpush1.msra.mxu0 0.0
    %331 = vmatprep.subr.mxu0 0.0
    %332 = vmatpush1.msra.mxu0 0.0
    %333 = vmatprep.subr.mxu0 0.0
    %334 = vmatpush1.msra.mxu0 0.0
    %335 = vmatprep.subr.mxu0 0.0
    %336 = vmatpush1.msra.mxu0 0.0
    %337 = vmatprep.mubr.f32.mxu0 0.0
    %338 = vmatmul.mubr.f32.gmra.mrb[0].mxu0 %v266
    %v339 = vpop.f32.mrb[0].mxu0
    %v340 = vadd.f32 %v271, %v339
    %v341 = vpop.f32.mrb[0].mxu0
    %342 = vdwg.mxu0
    %343 = vst [vmem:[#allocation11] sm:$0xff] %v340
    // Predicated region
    $region41: #{tpu_custom_call.1} parent=1 // pred_check
      _
    $region42: #{tpu_custom_call.1} parent=1 // pred_check_branch
      %345 = sbr.rel (0) target = $region44
    $region43: #{tpu_custom_call.1} parent=1 // pred_region
      %s347 = ssub.s32 128, 128
      %348 = vsyncadd [#allocation7], %s347
      %s350 = sshll.u32 [#allocation11], 4
      %s351 = int_to_ptr.vmem [resolvable:$true] %s350
      %353 = dma.vmem_to_hbm [thread:$0]  %s351, 128, %s6, [#allocation7]
    $region44: #{tpu_custom_call.1} parent=1 // pred_fallthru
      _
    // Predicated region
    $region45: #{tpu_custom_call.1} parent=1 // pred_check
      _
    $region46: #{tpu_custom_call.1} parent=1 // pred_check_branch
      %355 = sbr.rel (0) target = $region48
    $region47: #{tpu_custom_call.1} parent=1 // pred_region
      %356 = dma.done [#allocation7], 128
    $region48: #{tpu_custom_call.1} parent=1 // pred_fallthru
      _
    %357 = vsyncpa [#allocation6], 1
    %358 = vsyncpa [#allocation9], 1
    %359 = vsyncpa [#allocation7], 1

</llo_original>
